<compile_context>
chip_gen: v6e
topology: v6e:2x2x1
jax: 0.10.0
libtpu: 0.0.40
codegen_flags: <defaults>
</compile_context>

<pallas_src>
import jax
import jax.numpy as jnp
from jax.experimental import pallas as pl
from jax.experimental.pallas import tpu as pltpu

VEC = 6          # raw state-vector width
IN_DIM = 12      # 3 + 6 + 3 per branch
HID = 10
OUT_DIM = 3
NUM_LAYERS = 4

IN_W = 19        # packed input width: [v_B(6), gamma(6), w_B_ext(6), const 1]
HID_W = 32       # packed hidden width (both branches + bias lane)
OUT_W = 8        # packed output width (lanes 0..2 lin, 3..5 ang)
MAX_SUB = 512    # max rows per grid block

# lane layout
#   input  lanes 0..5 : v_B, 6..11 : gamma, 12..17 : w_B_ext, 18 : constant 1
#   hidden lanes 0..9 : lin branch, 16..25 : ang branch, 31 : constant 1 (bias)
#   output lanes 0..2 : lin output, 3..5 : ang output
LIN_MAP = (0, 1, 2, 6, 7, 8, 9, 10, 11, 12, 13, 14)   # input lanes -> lin layer 1
ANG_MAP = (3, 4, 5, 6, 7, 8, 9, 10, 11, 15, 16, 17)   # input lanes -> ang layer 1
LIN_OFF = 0
ANG_OFF = 16
ONE_LANE = 18    # constant-1 lane in the 19-wide input
BIAS_LANE = 31   # constant-1 lane in the 32-wide hidden state


def _round_up(x, m):
    return ((x + m - 1) // m) * m


def _knode_kernel(x_ref, w1_ref, w2_ref, w3_ref, w4_ref, o_ref):
    """Fused 4-layer block-diagonal MLP; both branches handled per dot."""
    h = jnp.maximum(jnp.dot(x_ref[...], w1_ref[...],
                            preferred_element_type=jnp.float32), 0.0)
    h = jnp.maximum(jnp.dot(h, w2_ref[...],
                            preferred_element_type=jnp.float32), 0.0)
    h = jnp.maximum(jnp.dot(h, w3_ref[...],
                            preferred_element_type=jnp.float32), 0.0)
    o_ref[...] = jnp.dot(h, w4_ref[...], preferred_element_type=jnp.float32)


@jax.jit
def knode_forward_batched(v_B, gamma, w_B_ext, packed):
    """Batched forward: v_B/gamma/w_B_ext are (B, 6); returns (B, 6)."""
    w1, w2, w3, w4 = packed
    B = v_B.shape[0]

    # one small concatenate builds the 19-lane input row (constant-1 lane last);
    # no 128-lane padded activation is ever written to HBM.
    x = jnp.concatenate(
        [v_B.astype(jnp.float32), gamma.astype(jnp.float32),
         w_B_ext.astype(jnp.float32),
         jnp.ones((B, 1), jnp.float32)], axis=1)                     # (B, 19)

    SUB = MAX_SUB if B >= MAX_SUB else _round_up(max(B, 1), 8)
    Rp = _round_up(B, SUB)
    if Rp != B:
        x = jnp.pad(x, ((0, Rp - B), (0, 0)))   # zero rows stay exactly zero

    out = pl.pallas_call(
        _knode_kernel,
        out_shape=jax.ShapeDtypeStruct((Rp, OUT_W), jnp.float32),
        grid=(Rp // SUB,),
        in_specs=[pl.BlockSpec((SUB, IN_W), lambda i: (i, 0)),
                  pl.BlockSpec((IN_W, HID_W), lambda i: (0, 0)),
                  pl.BlockSpec((HID_W, HID_W), lambda i: (0, 0)),
                  pl.BlockSpec((HID_W, HID_W), lambda i: (0, 0)),
                  pl.BlockSpec((HID_W, OUT_W), lambda i: (0, 0))],
        out_specs=pl.BlockSpec((SUB, OUT_W), lambda i: (i, 0)),
        compiler_params=pltpu.CompilerParams(
            dimension_semantics=("parallel",)),
    )(x, w1, w2, w3, w4)

    # lanes 0..2 = lin output, 3..5 = ang output (already concatenated)
    return out[:B, :2 * OUT_DIM]


@jax.jit
def knode_forward(v_B_t, gamma_t, w_B_ext_t, packed):
    """Single-state forward(), matching the PyTorch module signature.
    NOTE: at B=1 dispatch overhead dominates; batch RK4 stages / prediction
    timesteps through knode_forward_batched in real drivers."""
    return knode_forward_batched(v_B_t[None, :], gamma_t[None, :],
                                 w_B_ext_t[None, :], packed)[0]


# ----------------------------- parameters ----------------------------------

def init_params(key):
    """Raw per-branch weights, nn.Linear default init U(-1/sqrt(fan_in), +...).
    Returns list of 4 layers, each ((W_lin, b_lin), (W_ang, b_ang)) with W in
    PyTorch (out_features, in_features) layout."""
    dims = [(IN_DIM, HID), (HID, HID), (HID, HID), (HID, OUT_DIM)]
    raw = []
    for (fi, fo) in dims:
        bound = 1.0 / (fi ** 0.5)
        branches = []
        for _ in range(2):           # 0: linear_acc_layers, 1: angular_acc_layers
            key, kw_, kb_ = jax.random.split(key, 3)
            W = jax.random.uniform(kw_, (fo, fi), jnp.float32, -bound, bound)
            b = jax.random.uniform(kb_, (fo,), jnp.float32, -bound, bound)
            branches.append((W, b))
        raw.append(tuple(branches))
    return raw


def pack_params(raw):
    """Pack both branches of every layer into one small block-diagonal tile:
    layer 1 -> (19,32) with input routing + bias row at the constant-1 input
    lane (+ a 1.0 that regenerates the hidden bias lane), layers 2-3 -> (32,32)
    with the bias row at hidden lane 31, layer 4 -> (32,8) writing output lanes
    0..5.  One-time host-side setup."""
    packed = []
    for li, ((Wl, bl), (Wa, ba)) in enumerate(raw):
        fo, fi = Wl.shape
        first = (li == 0)
        last = (li == NUM_LAYERS - 1)
        n_rows = IN_W if first else HID_W
        n_cols = OUT_W if last else HID_W
        P = jnp.zeros((n_rows, n_cols), jnp.float32)

        if first:
            lin_rows = jnp.asarray(LIN_MAP)
            ang_rows = jnp.asarray(ANG_MAP)
            bias_row = ONE_LANE
        else:
            lin_rows = jnp.arange(fi) + LIN_OFF
            ang_rows = jnp.arange(fi) + ANG_OFF
            bias_row = BIAS_LANE

        if last:
            lin_cols = jnp.arange(fo)              # output lanes 0..2
            ang_cols = jnp.arange(fo) + OUT_DIM    # output lanes 3..5
        else:
            lin_cols = jnp.arange(fo) + LIN_OFF
            ang_cols = jnp.arange(fo) + ANG_OFF

        P = P.at[lin_rows[:, None], lin_cols[None, :]].set(Wl.T)
        P = P.at[ang_rows[:, None], ang_cols[None, :]].set(Wa.T)
        P = P.at[bias_row, lin_cols].set(bl)
        P = P.at[bias_row, ang_cols].set(ba)
        if not last:
            P = P.at[bias_row, BIAS_LANE].set(1.0)   # keep the 1.0 alive
        packed.append(P)
    return tuple(packed)


# ----------------------------- reference ------------------------------------

def _ref_forward(v, g, w, raw):
    """Pure-JAX reference of KNODE.forward (PyTorch fp32 semantics)."""
    def mlp(x, branch):
        h = x
        for i, layer in enumerate(raw):
            W, b = layer[branch]
            h = h @ W.T + b
            if i < NUM_LAYERS - 1:
                h = jnp.maximum(h, 0.0)
        return h
    lin = mlp(jnp.concatenate([v[:3], g, w[:3]]), 0)
    ang = mlp(jnp.concatenate([v[3:], g, w[3:]]), 1)
    return jnp.concatenate([lin, ang])


if __name__ == "__main__":
    key = jax.random.PRNGKey(0)
    kp, kv, kg, kw = jax.random.split(key, 4)
    raw_params = init_params(kp)
    packed_params = pack_params(raw_params)

    v_B_t = jax.random.normal(kv, (VEC,), jnp.float32)
    gamma_t = jax.random.normal(kg, (VEC,), jnp.float32)
    w_B_ext_t = jax.random.normal(kw, (VEC,), jnp.float32)

    # single-state forward (the PyTorch module's forward())
    delta_dv_B = knode_forward(v_B_t, gamma_t, w_B_ext_t, packed_params)
    jax.block_until_ready(delta_dv_B)
    ref = _ref_forward(v_B_t, gamma_t, w_B_ext_t, raw_params)
    assert delta_dv_B.shape == (VEC,)
    assert jnp.allclose(delta_dv_B, ref, atol=1e-4, rtol=1e-4), (delta_dv_B, ref)

    # small batch (exercises SUB = round_up(B,8) and zero-row padding)
    B = 5
    kb1, kb2, kb3 = jax.random.split(jax.random.PRNGKey(1), 3)
    v_b = jax.random.normal(kb1, (B, VEC), jnp.float32)
    g_b = jax.random.normal(kb2, (B, VEC), jnp.float32)
    w_b = jax.random.normal(kb3, (B, VEC), jnp.float32)
    out_b = knode_forward_batched(v_b, g_b, w_b, packed_params)
    jax.block_until_ready(out_b)
    ref_b = jnp.stack([_ref_forward(v_b[i], g_b[i], w_b[i], raw_params) for i in range(B)])
    assert out_b.shape == (B, VEC)
    assert jnp.allclose(out_b, ref_b, atol=1e-4, rtol=1e-4), (out_b, ref_b)

    # larger batch (exercises SUB=512, multi-block grid, megacore parallel axis)
    B2 = 600
    kb4, kb5, kb6 = jax.random.split(jax.random.PRNGKey(2), 3)
    v_b2 = jax.random.normal(kb4, (B2, VEC), jnp.float32)
    g_b2 = jax.random.normal(kb5, (B2, VEC), jnp.float32)
    w_b2 = jax.random.normal(kb6, (B2, VEC), jnp.float32)
    out_b2 = knode_forward_batched(v_b2, g_b2, w_b2, packed_params)
    jax.block_until_ready(out_b2)
    ref_b2 = jax.vmap(lambda v, g, w: _ref_forward(v, g, w, raw_params))(v_b2, g_b2, w_b2)
    assert out_b2.shape == (B2, VEC)
    assert jnp.allclose(out_b2, ref_b2, atol=1e-4, rtol=1e-4)

    print("KERNEL_OK")
</pallas_src>

<mosaic_0001>
module attributes {stable_mosaic.version = 11 : i64} {
  func.func @_knode_kernel(%arg0: i32, %arg1: memref<8x19xf32, #tpu.memory_space<vmem>>, %arg2: memref<19x32xf32, #tpu.memory_space<vmem>>, %arg3: memref<32x32xf32, #tpu.memory_space<vmem>>, %arg4: memref<32x32xf32, #tpu.memory_space<vmem>>, %arg5: memref<32x8xf32, #tpu.memory_space<vmem>>, %arg6: memref<8x8xf32, #tpu.memory_space<vmem>>) attributes {dimension_semantics = [#tpu.dimension_semantics<parallel>], iteration_bounds = array<i64: 1>, scalar_prefetch = 0 : i64, scratch_operands = 0 : i64, tpu.core_type = #tpu.core_type<tc>, window_params = [{transform_indices = @transform_0, window_bounds = array<i64: 8, 19>}, {pipeline_mode = #tpu.pipeline_mode<synchronous>, transform_indices = @transform_1, window_bounds = array<i64: 19, 32>}, {pipeline_mode = #tpu.pipeline_mode<synchronous>, transform_indices = @transform_2, window_bounds = array<i64: 32, 32>}, {pipeline_mode = #tpu.pipeline_mode<synchronous>, transform_indices = @transform_3, window_bounds = array<i64: 32, 32>}, {pipeline_mode = #tpu.pipeline_mode<synchronous>, transform_indices = @transform_4, window_bounds = array<i64: 32, 8>}, {transform_indices = @transform_5, window_bounds = array<i64: 8, 8>}]} {
    %c0 = arith.constant 0 : index
    %c0_0 = arith.constant 0 : index
    %0 = vector.load %arg1[%c0, %c0_0] : memref<8x19xf32, #tpu.memory_space<vmem>>, vector<8x19xf32>
    %c0_1 = arith.constant 0 : index
    %c0_2 = arith.constant 0 : index
    %1 = vector.load %arg2[%c0_1, %c0_2] : memref<19x32xf32, #tpu.memory_space<vmem>>, vector<19x32xf32>
    %cst = arith.constant dense<0.000000e+00> : vector<8x32xf32>
    %2 = tpu.matmul %0, %1, %cst {dimension_numbers = #tpu.dot_dimension_numbers<[1], [0], [0], [1], [0, 0, 1, 1], [], []>} : vector<8x19xf32>, vector<19x32xf32>, vector<8x32xf32> -> vector<8x32xf32>
    %cst_3 = arith.constant 0.000000e+00 : f32
    %3 = vector.broadcast %cst_3 : f32 to vector<8x32xf32>
    %4 = arith.maximumf %2, %3 : vector<8x32xf32>
    %c0_4 = arith.constant 0 : index
    %c0_5 = arith.constant 0 : index
    %5 = vector.load %arg3[%c0_4, %c0_5] : memref<32x32xf32, #tpu.memory_space<vmem>>, vector<32x32xf32>
    %cst_6 = arith.constant dense<0.000000e+00> : vector<8x32xf32>
    %6 = tpu.matmul %4, %5, %cst_6 {dimension_numbers = #tpu.dot_dimension_numbers<[1], [0], [0], [1], [0, 0, 1, 1], [], []>} : vector<8x32xf32>, vector<32x32xf32>, vector<8x32xf32> -> vector<8x32xf32>
    %cst_7 = arith.constant 0.000000e+00 : f32
    %7 = vector.broadcast %cst_7 : f32 to vector<8x32xf32>
    %8 = arith.maximumf %6, %7 : vector<8x32xf32>
    %c0_8 = arith.constant 0 : index
    %c0_9 = arith.constant 0 : index
    %9 = vector.load %arg4[%c0_8, %c0_9] : memref<32x32xf32, #tpu.memory_space<vmem>>, vector<32x32xf32>
    %cst_10 = arith.constant dense<0.000000e+00> : vector<8x32xf32>
    %10 = tpu.matmul %8, %9, %cst_10 {dimension_numbers = #tpu.dot_dimension_numbers<[1], [0], [0], [1], [0, 0, 1, 1], [], []>} : vector<8x32xf32>, vector<32x32xf32>, vector<8x32xf32> -> vector<8x32xf32>
    %cst_11 = arith.constant 0.000000e+00 : f32
    %11 = vector.broadcast %cst_11 : f32 to vector<8x32xf32>
    %12 = arith.maximumf %10, %11 : vector<8x32xf32>
    %c0_12 = arith.constant 0 : index
    %c0_13 = arith.constant 0 : index
    %13 = vector.load %arg5[%c0_12, %c0_13] : memref<32x8xf32, #tpu.memory_space<vmem>>, vector<32x8xf32>
    %cst_14 = arith.constant dense<0.000000e+00> : vector<8x8xf32>
    %14 = tpu.matmul %12, %13, %cst_14 {dimension_numbers = #tpu.dot_dimension_numbers<[1], [0], [0], [1], [0, 0, 1, 1], [], []>} : vector<8x32xf32>, vector<32x8xf32>, vector<8x8xf32> -> vector<8x8xf32>
    %c0_15 = arith.constant 0 : index
    %c0_16 = arith.constant 0 : index
    %15 = vector.load %arg6[%c0_15, %c0_16] : memref<8x8xf32, #tpu.memory_space<vmem>>, vector<8x8xf32>
    tpu.vector_store %arg6[%c0_15, %c0_16], %14 {strides = array<i32>} : memref<8x8xf32, #tpu.memory_space<vmem>>, vector<8x8xf32>,
    return
  }
  func.func @transform_0(%arg0: i32) -> (i32, i32) {
    %c0_i32 = arith.constant 0 : i32
    %c0_i32_0 = arith.constant 0 : i32
    return %arg0, %c0_i32 : i32, i32
  }
  func.func @transform_1(%arg0: i32) -> (i32, i32) {
    %c0_i32 = arith.constant 0 : i32
    %c0_i32_0 = arith.constant 0 : i32
    %c0_i32_1 = arith.constant 0 : i32
    return %c0_i32, %c0_i32_0 : i32, i32
  }
  func.func @transform_2(%arg0: i32) -> (i32, i32) {
    %c0_i32 = arith.constant 0 : i32
    %c0_i32_0 = arith.constant 0 : i32
    %c0_i32_1 = arith.constant 0 : i32
    return %c0_i32, %c0_i32_0 : i32, i32
  }
  func.func @transform_3(%arg0: i32) -> (i32, i32) {
    %c0_i32 = arith.constant 0 : i32
    %c0_i32_0 = arith.constant 0 : i32
    %c0_i32_1 = arith.constant 0 : i32
    return %c0_i32, %c0_i32_0 : i32, i32
  }
  func.func @transform_4(%arg0: i32) -> (i32, i32) {
    %c0_i32 = arith.constant 0 : i32
    %c0_i32_0 = arith.constant 0 : i32
    %c0_i32_1 = arith.constant 0 : i32
    return %c0_i32, %c0_i32_0 : i32, i32
  }
  func.func @transform_5(%arg0: i32) -> (i32, i32) {
    %c0_i32 = arith.constant 0 : i32
    %c0_i32_0 = arith.constant 0 : i32
    return %arg0, %c0_i32 : i32, i32
  }
}

</mosaic_0001>

<llo_original>
// kernel: knode_forward_batched.1
$region0: #{knode_forward_batched.1}
  #allocation0 [shape = 'u32[]', space=smem, size = 0x4, offset = 0x4, fixed_abs, tag = 'smem constant byte address 0x4 - core index']
  #allocation1 [shape = 'u32[144,128]{1,0:T(1,128)}', space=vmem, size = 0x12000, scoped, tag = 'internal scratch']
  %s0 = inlined_call_operand.vmem [shape: f32[8,19], index: 0, kind: input, shape index: {}]
  %s1 = inlined_call_operand.vmem [shape: f32[19,32], index: 1, kind: input, shape index: {}]
  %s2 = inlined_call_operand.vmem [shape: f32[32,32], index: 2, kind: input, shape index: {}]
  %s3 = inlined_call_operand.hbm [shape: f32[32,32], index: 3, kind: input, shape index: {}]
  %s4 = inlined_call_operand.vmem [shape: f32[32,8], index: 4, kind: input, shape index: {}]
  %s5 = inlined_call_operand.vmem [shape: f32[8,8], index: 5, kind: output, shape index: {}]
  %s6 = sld [smem:[#allocation0]]
  $region34: #{knode_forward_batched.1} parent=0
    _
  %s8 = ssub.s32 1, %s6
  %s9 = scalar_select 0, %s8, %s6
  $region1: #{knode_forward_batched.1} parent=0
    #allocation2 [shape = 'u8[16384]{0}', space=vmem, size = 0x4000, scoped, tag = 'input window, operand 3, single buffered']
    #allocation3 [shape = 's32[1]{0}', space=sflag, size = 0x4, scoped, tag = 'scoped memory for knode_forward_batched.1']
    %10 = vsyncpa [#allocation3], 0
    // Predicated region
    $region2: #{knode_forward_batched.1} parent=1 // pred_check
      _
    $region3: #{knode_forward_batched.1} parent=1 // pred_check_branch
      %12 = sbr.rel (0) target = $region5
    $region4: #{knode_forward_batched.1} parent=1 // pred_region
      _
    $region5: #{knode_forward_batched.1} parent=1 // pred_fallthru
      _
    // Predicated region
    $region6: #{knode_forward_batched.1} parent=1 // pred_check
      _
    $region7: #{knode_forward_batched.1} parent=1 // pred_check_branch
      %14 = sbr.rel (0) target = $region9
    $region8: #{knode_forward_batched.1} parent=1 // pred_region
      _
    $region9: #{knode_forward_batched.1} parent=1 // pred_fallthru
      _
    // Predicated region
    $region10: #{knode_forward_batched.1} parent=1 // pred_check
      _
    $region11: #{knode_forward_batched.1} parent=1 // pred_check_branch
      %16 = sbr.rel (0) target = $region13
    $region12: #{knode_forward_batched.1} parent=1 // pred_region
      _
    $region13: #{knode_forward_batched.1} parent=1 // pred_fallthru
      _
    // Predicated region
    $region14: #{knode_forward_batched.1} parent=1 // pred_check
      _
    $region15: #{knode_forward_batched.1} parent=1 // pred_check_branch
      %18 = sbr.rel (0) target = $region17
    $region16: #{knode_forward_batched.1} parent=1 // pred_region
      %s20 = ssub.s32 512, 512
      %21 = vsyncadd [#allocation3], %s20
      %s22 = sshll.u32 [#allocation2], 4
      %s23 = int_to_ptr.vmem [resolvable:$true] %s22
      %28 = dma.hbm_to_vmem [thread:$0]  %s3, 512, %s23, [#allocation3], 128, 128, 8
    $region17: #{knode_forward_batched.1} parent=1 // pred_fallthru
      _
    // Predicated region
    $region18: #{knode_forward_batched.1} parent=1 // pred_check
      _
    $region19: #{knode_forward_batched.1} parent=1 // pred_check_branch
      %30 = sbr.rel (0) target = $region21
    $region20: #{knode_forward_batched.1} parent=1 // pred_region
      _
    $region21: #{knode_forward_batched.1} parent=1 // pred_fallthru
      _
    // Predicated region
    $region22: #{knode_forward_batched.1} parent=1 // pred_check
      _
    $region23: #{knode_forward_batched.1} parent=1 // pred_check_branch
      %32 = sbr.rel (0) target = $region25
    $region24: #{knode_forward_batched.1} parent=1 // pred_region
      %33 = dma.done [#allocation3], 512
    $region25: #{knode_forward_batched.1} parent=1 // pred_fallthru
      _
    %v34 = vld [vmem:[%s0] sm:$0xff]
    %v35 = vld [vmem:[%s1] sm:$0xff]
    %v36 = vld [vmem:[%s1 + $0x8] sm:$0xff]
    %v37 = vld [vmem:[%s1 + $0x10] sm:$0x7]
    %vm38 = vcmask 154624
    %v40 = vsel %vm38, %v34, 0
    %vm42 = vcmask 1042432
    %v44 = vsel %vm42, %v37, 0
    %46 = vmatprep.subr.mxu0 0.0
    %47 = vmatpush1.msra.mxu0 0.0
    %48 = vmatprep.subr.mxu0 0.0
    %49 = vmatpush1.msra.mxu0 0.0
    %50 = vmatprep.subr.mxu0 0.0
    %51 = vmatpush1.msra.mxu0 0.0
    %52 = vmatprep.subr.mxu0 0.0
    %53 = vmatpush1.msra.mxu0 0.0
    %54 = vmatprep.subr.mxu0 0.0
    %55 = vmatpush1.msra.mxu0 0.0
    %56 = vmatprep.subr.mxu0 0.0
    %57 = vmatpush1.msra.mxu0 0.0
    %58 = vmatprep.subr.mxu0 0.0
    %59 = vmatpush1.msra.mxu0 0.0
    %60 = vmatprep.subr.mxu0 0.0
    %61 = vmatpush1.msra.mxu0 0.0
    %62 = vmatprep.subr.mxu0 0.0
    %63 = vmatpush1.msra.mxu0 0.0
    %64 = vmatprep.subr.mxu0 0.0
    %65 = vmatpush1.msra.mxu0 0.0
    %66 = vmatprep.subr.mxu0 0.0
    %67 = vmatpush1.msra.mxu0 0.0
    %68 = vmatprep.subr.mxu0 0.0
    %69 = vmatpush1.msra.mxu0 0.0
    %70 = vmatprep.subr.mxu0 0.0
    %71 = vmatpush1.msra.mxu0 0.0
    %72 = vmatprep.subr.mxu0 0.0
    %73 = vmatpush1.msra.mxu0 %v44
    %74 = vmatprep.subr.mxu0 0.0
    %75 = vmatpush1.msra.mxu0 %v36
    %76 = vmatprep.subr.mxu0 0.0
    %77 = vmatpush1.msra.mxu0 %v35
    %78 = vmatprep.subr.mxu0 0.0
    %79 = vmatpush2.msra.mxu0 0.0
    %80 = vmatprep.subr.mxu0 0.0
    %81 = vmatpush2.msra.mxu0 0.0
    %82 = vmatprep.subr.mxu0 0.0
    %83 = vmatpush2.msra.mxu0 0.0
    %84 = vmatprep.subr.mxu0 0.0
    %85 = vmatpush2.msra.mxu0 0.0
    %86 = vmatprep.subr.mxu0 0.0
    %87 = vmatpush2.msra.mxu0 0.0
    %88 = vmatprep.subr.mxu0 0.0
    %89 = vmatpush2.msra.mxu0 0.0
    %90 = vmatprep.subr.mxu0 0.0
    %91 = vmatpush2.msra.mxu0 0.0
    %92 = vmatprep.subr.mxu0 0.0
    %93 = vmatpush2.msra.mxu0 0.0
    %94 = vmatprep.subr.mxu0 0.0
    %95 = vmatpush2.msra.mxu0 0.0
    %96 = vmatprep.subr.mxu0 0.0
    %97 = vmatpush2.msra.mxu0 0.0
    %98 = vmatprep.subr.mxu0 0.0
    %99 = vmatpush2.msra.mxu0 0.0
    %100 = vmatprep.subr.mxu0 0.0
    %101 = vmatpush2.msra.mxu0 0.0
    %102 = vmatprep.subr.mxu0 0.0
    %103 = vmatpush2.msra.mxu0 0.0
    %104 = vmatprep.subr.mxu0 0.0
    %105 = vmatpush2.msra.mxu0 0.0
    %106 = vmatprep.subr.mxu0 0.0
    %107 = vmatpush2.msra.mxu0 0.0
    %108 = vmatprep.subr.mxu0 0.0
    %109 = vmatpush2.msra.mxu0 0.0
    %110 = vmatprep.mubr.f32.mxu0 0.0
    %111 = vmatmul.mubr.f32.gmra.mxu0 %v40
    %v112 = vpop.f32.mrf.mxu0
    %v113 = vadd.f32 0.0, %v112
    %v114 = vpop.f32.mrf.mxu0
    %115 = vdwg.mxu0
    %v116 = vmax.f32 %v113, 0.0
    %v117 = vld [vmem:[%s2] sm:$0xff]
    %v118 = vld [vmem:[%s2 + $0x8] sm:$0xff]
    %v119 = vld [vmem:[%s2 + $0x10] sm:$0xff]
    %v120 = vld [vmem:[%s2 + $0x18] sm:$0xff]
    %vm121 = vcmask 261120
    %v123 = vsel %vm121, %v116, 0
    %125 = vmatprep.subr.mxu0 0.0
    %126 = vmatpush1.msra.mxu0 0.0
    %127 = vmatprep.subr.mxu0 0.0
    %128 = vmatpush1.msra.mxu0 0.0
    %129 = vmatprep.subr.mxu0 0.0
    %130 = vmatpush1.msra.mxu0 0.0
    %131 = vmatprep.subr.mxu0 0.0
    %132 = vmatpush1.msra.mxu0 0.0
    %133 = vmatprep.subr.mxu0 0.0
    %134 = vmatpush1.msra.mxu0 0.0
    %135 = vmatprep.subr.mxu0 0.0
    %136 = vmatpush1.msra.mxu0 0.0
    %137 = vmatprep.subr.mxu0 0.0
    %138 = vmatpush1.msra.mxu0 0.0
    %139 = vmatprep.subr.mxu0 0.0
    %140 = vmatpush1.msra.mxu0 0.0
    %141 = vmatprep.subr.mxu0 0.0
    %142 = vmatpush1.msra.mxu0 0.0
    %143 = vmatprep.subr.mxu0 0.0
    %144 = vmatpush1.msra.mxu0 0.0
    %145 = vmatprep.subr.mxu0 0.0
    %146 = vmatpush1.msra.mxu0 0.0
    %147 = vmatprep.subr.mxu0 0.0
    %148 = vmatpush1.msra.mxu0 0.0
    %149 = vmatprep.subr.mxu0 0.0
    %150 = vmatpush1.msra.mxu0 %v120
    %151 = vmatprep.subr.mxu0 0.0
    %152 = vmatpush1.msra.mxu0 %v119
    %153 = vmatprep.subr.mxu0 0.0
    %154 = vmatpush1.msra.mxu0 %v118
    %155 = vmatprep.subr.mxu0 0.0
    %156 = vmatpush1.msra.mxu0 %v117
    %157 = vmatprep.subr.mxu0 0.0
    %158 = vmatpush2.msra.mxu0 0.0
    %159 = vmatprep.subr.mxu0 0.0
    %160 = vmatpush2.msra.mxu0 0.0
    %161 = vmatprep.subr.mxu0 0.0
    %162 = vmatpush2.msra.mxu0 0.0
    %163 = vmatprep.subr.mxu0 0.0
    %164 = vmatpush2.msra.mxu0 0.0
    %165 = vmatprep.subr.mxu0 0.0
    %166 = vmatpush2.msra.mxu0 0.0
    %167 = vmatprep.subr.mxu0 0.0
    %168 = vmatpush2.msra.mxu0 0.0
    %169 = vmatprep.subr.mxu0 0.0
    %170 = vmatpush2.msra.mxu0 0.0
    %171 = vmatprep.subr.mxu0 0.0
    %172 = vmatpush2.msra.mxu0 0.0
    %173 = vmatprep.subr.mxu0 0.0
    %174 = vmatpush2.msra.mxu0 0.0
    %175 = vmatprep.subr.mxu0 0.0
    %176 = vmatpush2.msra.mxu0 0.0
    %177 = vmatprep.subr.mxu0 0.0
    %178 = vmatpush2.msra.mxu0 0.0
    %179 = vmatprep.subr.mxu0 0.0
    %180 = vmatpush2.msra.mxu0 0.0
    %181 = vmatprep.subr.mxu0 0.0
    %182 = vmatpush2.msra.mxu0 0.0
    %183 = vmatprep.subr.mxu0 0.0
    %184 = vmatpush2.msra.mxu0 0.0
    %185 = vmatprep.subr.mxu0 0.0
    %186 = vmatpush2.msra.mxu0 0.0
    %187 = vmatprep.subr.mxu0 0.0
    %188 = vmatpush2.msra.mxu0 0.0
    %189 = vmatprep.mubr.f32.mxu0 0.0
    %190 = vmatmul.mubr.f32.gmra.mxu0 %v123
    %v191 = vpop.f32.mrf.mxu0
    %v192 = vadd.f32 0.0, %v191
    %v193 = vpop.f32.mrf.mxu0
    %194 = vdwg.mxu0
    %v195 = vmax.f32 %v192, 0.0
    %v196 = vld [vmem:[#allocation2] sm:$0xff]
    %v197 = vld [vmem:[#allocation2 + $0x8] sm:$0xff]
    %v198 = vld [vmem:[#allocation2 + $0x10] sm:$0xff]
    %v199 = vld [vmem:[#allocation2 + $0x18] sm:$0xff]
    %v201 = vsel %vm121, %v195, 0
    %203 = vmatprep.subr.mxu0 0.0
    %204 = vmatpush1.msra.mxu0 0.0
    %205 = vmatprep.subr.mxu0 0.0
    %206 = vmatpush1.msra.mxu0 0.0
    %207 = vmatprep.subr.mxu0 0.0
    %208 = vmatpush1.msra.mxu0 0.0
    %209 = vmatprep.subr.mxu0 0.0
    %210 = vmatpush1.msra.mxu0 0.0
    %211 = vmatprep.subr.mxu0 0.0
    %212 = vmatpush1.msra.mxu0 0.0
    %213 = vmatprep.subr.mxu0 0.0
    %214 = vmatpush1.msra.mxu0 0.0
    %215 = vmatprep.subr.mxu0 0.0
    %216 = vmatpush1.msra.mxu0 0.0
    %217 = vmatprep.subr.mxu0 0.0
    %218 = vmatpush1.msra.mxu0 0.0
    %219 = vmatprep.subr.mxu0 0.0
    %220 = vmatpush1.msra.mxu0 0.0
    %221 = vmatprep.subr.mxu0 0.0
    %222 = vmatpush1.msra.mxu0 0.0
    %223 = vmatprep.subr.mxu0 0.0
    %224 = vmatpush1.msra.mxu0 0.0
    %225 = vmatprep.subr.mxu0 0.0
    %226 = vmatpush1.msra.mxu0 0.0
    %227 = vmatprep.subr.mxu0 0.0
    %228 = vmatpush1.msra.mxu0 %v199
    %229 = vmatprep.subr.mxu0 0.0
    %230 = vmatpush1.msra.mxu0 %v198
    %231 = vmatprep.subr.mxu0 0.0
    %232 = vmatpush1.msra.mxu0 %v197
    %233 = vmatprep.subr.mxu0 0.0
    %234 = vmatpush1.msra.mxu0 %v196
    %235 = vmatprep.subr.mxu0 0.0
    %236 = vmatpush2.msra.mxu0 0.0
    %237 = vmatprep.subr.mxu0 0.0
    %238 = vmatpush2.msra.mxu0 0.0
    %239 = vmatprep.subr.mxu0 0.0
    %240 = vmatpush2.msra.mxu0 0.0
    %241 = vmatprep.subr.mxu0 0.0
    %242 = vmatpush2.msra.mxu0 0.0
    %243 = vmatprep.subr.mxu0 0.0
    %244 = vmatpush2.msra.mxu0 0.0
    %245 = vmatprep.subr.mxu0 0.0
    %246 = vmatpush2.msra.mxu0 0.0
    %247 = vmatprep.subr.mxu0 0.0
    %248 = vmatpush2.msra.mxu0 0.0
    %249 = vmatprep.subr.mxu0 0.0
    %250 = vmatpush2.msra.mxu0 0.0
    %251 = vmatprep.subr.mxu0 0.0
    %252 = vmatpush2.msra.mxu0 0.0
    %253 = vmatprep.subr.mxu0 0.0
    %254 = vmatpush2.msra.mxu0 0.0
    %255 = vmatprep.subr.mxu0 0.0
    %256 = vmatpush2.msra.mxu0 0.0
    %257 = vmatprep.subr.mxu0 0.0
    %258 = vmatpush2.msra.mxu0 0.0
    %259 = vmatprep.subr.mxu0 0.0
    %260 = vmatpush2.msra.mxu0 0.0
    %261 = vmatprep.subr.mxu0 0.0
    %262 = vmatpush2.msra.mxu0 0.0
    %263 = vmatprep.subr.mxu0 0.0
    %264 = vmatpush2.msra.mxu0 0.0
    %265 = vmatprep.subr.mxu0 0.0
    %266 = vmatpush2.msra.mxu0 0.0
    %267 = vmatprep.mubr.f32.mxu0 0.0
    %268 = vmatmul.mubr.f32.gmra.mxu0 %v201
    %v269 = vpop.f32.mrf.mxu0
    %v270 = vadd.f32 0.0, %v269
    %v271 = vpop.f32.mrf.mxu0
    %272 = vdwg.mxu0
    %v273 = vmax.f32 %v270, 0.0
    %v274 = vld [vmem:[%s4] sm:$0xff]
    %v275 = vld [vmem:[%s4 + $0x8] sm:$0xff]
    %v276 = vld [vmem:[%s4 + $0x10] sm:$0xff]
    %v277 = vld [vmem:[%s4 + $0x18] sm:$0xff]
    %v279 = vsel %vm121, %v273, 0
    %281 = vmatprep.subr.mxu0 0.0
    %282 = vmatpush1.msra.mxu0 0.0
    %283 = vmatprep.subr.mxu0 0.0
    %284 = vmatpush1.msra.mxu0 0.0
    %285 = vmatprep.subr.mxu0 0.0
    %286 = vmatpush1.msra.mxu0 0.0
    %287 = vmatprep.subr.mxu0 0.0
    %288 = vmatpush1.msra.mxu0 0.0
    %289 = vmatprep.subr.mxu0 0.0
    %290 = vmatpush1.msra.mxu0 0.0
    %291 = vmatprep.subr.mxu0 0.0
    %292 = vmatpush1.msra.mxu0 0.0
    %293 = vmatprep.subr.mxu0 0.0
    %294 = vmatpush1.msra.mxu0 0.0
    %295 = vmatprep.subr.mxu0 0.0
    %296 = vmatpush1.msra.mxu0 0.0
    %297 = vmatprep.subr.mxu0 0.0
    %298 = vmatpush1.msra.mxu0 0.0
    %299 = vmatprep.subr.mxu0 0.0
    %300 = vmatpush1.msra.mxu0 0.0
    %301 = vmatprep.subr.mxu0 0.0
    %302 = vmatpush1.msra.mxu0 0.0
    %303 = vmatprep.subr.mxu0 0.0
    %304 = vmatpush1.msra.mxu0 0.0
    %305 = vmatprep.subr.mxu0 0.0
    %306 = vmatpush1.msra.mxu0 %v277
    %307 = vmatprep.subr.mxu0 0.0
    %308 = vmatpush1.msra.mxu0 %v276
    %309 = vmatprep.subr.mxu0 0.0
    %310 = vmatpush1.msra.mxu0 %v275
    %311 = vmatprep.subr.mxu0 0.0
    %312 = vmatpush1.msra.mxu0 %v274
    %313 = vmatprep.subr.mxu0 0.0
    %314 = vmatpush2.msra.mxu0 0.0
    %315 = vmatprep.subr.mxu0 0.0
    %316 = vmatpush2.msra.mxu0 0.0
    %317 = vmatprep.subr.mxu0 0.0
    %318 = vmatpush2.msra.mxu0 0.0
    %319 = vmatprep.subr.mxu0 0.0
    %320 = vmatpush2.msra.mxu0 0.0
    %321 = vmatprep.subr.mxu0 0.0
    %322 = vmatpush2.msra.mxu0 0.0
    %323 = vmatprep.subr.mxu0 0.0
    %324 = vmatpush2.msra.mxu0 0.0
    %325 = vmatprep.subr.mxu0 0.0
    %326 = vmatpush2.msra.mxu0 0.0
    %327 = vmatprep.subr.mxu0 0.0
    %328 = vmatpush2.msra.mxu0 0.0
    %329 = vmatprep.subr.mxu0 0.0
    %330 = vmatpush2.msra.mxu0 0.0
    %331 = vmatprep.subr.mxu0 0.0
    %332 = vmatpush2.msra.mxu0 0.0
    %333 = vmatprep.subr.mxu0 0.0
    %334 = vmatpush2.msra.mxu0 0.0
    %335 = vmatprep.subr.mxu0 0.0
    %336 = vmatpush2.msra.mxu0 0.0
    %337 = vmatprep.subr.mxu0 0.0
    %338 = vmatpush2.msra.mxu0 0.0
    %339 = vmatprep.subr.mxu0 0.0
    %340 = vmatpush2.msra.mxu0 0.0
    %341 = vmatprep.subr.mxu0 0.0
    %342 = vmatpush2.msra.mxu0 0.0
    %343 = vmatprep.subr.mxu0 0.0
    %344 = vmatpush2.msra.mxu0 0.0
    %345 = vmatprep.mubr.f32.mxu0 0.0
    %346 = vmatmul.mubr.f32.gmra.mxu0 %v279
    %v347 = vpop.f32.mrf.mxu0
    %v348 = vadd.f32 0.0, %v347
    %v349 = vpop.f32.mrf.mxu0
    %350 = vdwg.mxu0
    %vm351 = vcmask 64512
    %352 = vst.msk [vmem:[%s5] sm:$0xff] %vm351, %v348
    // Predicated region
    $region26: #{knode_forward_batched.1} parent=1 // pred_check
      _
    $region27: #{knode_forward_batched.1} parent=1 // pred_check_branch
      %354 = sbr.rel (0) target = $region29
    $region28: #{knode_forward_batched.1} parent=1 // pred_region
      _
    $region29: #{knode_forward_batched.1} parent=1 // pred_fallthru
      _
    // Predicated region
    $region30: #{knode_forward_batched.1} parent=1 // pred_check
      _
    $region31: #{knode_forward_batched.1} parent=1 // pred_check_branch
      %356 = sbr.rel (0) target = $region33
    $region32: #{knode_forward_batched.1} parent=1 // pred_region
      _
    $region33: #{knode_forward_batched.1} parent=1 // pred_fallthru
      _
    %357 = vsyncpa [#allocation3], 1

</llo_original>
